<compile_context>
chip_gen: v7x
topology: tpu7x:2x2x1
jax: 0.10.0
libtpu: 0.0.40
codegen_flags: <defaults>
</compile_context>

<pallas_src>
import functools

import jax
import jax.numpy as jnp
from jax.experimental import pallas as pl
from jax.experimental.pallas import tpu as pltpu


def _leaky_relu(x, slope=0.1):
    return jnp.where(x > 0, x, slope * x)


def _round_up(x, m):
    return (x + m - 1) // m * m


def _vmem_budget():
    """Generation-aware (scoped-VMEM ceiling bytes, default spatial tile hint)."""
    try:
        cap = int(pltpu.get_tpu_info().vmem_capacity_bytes)
    except Exception:
        cap = 64 * 1024 * 1024
    if cap >= 96 * 1024 * 1024:          # v5e / v6e: 128 MiB physical VMEM
        return 100 * 1024 * 1024, 4096
    # v7x: 64 MiB physical -> leave headroom for Mosaic internal scratch
    return 48 * 1024 * 1024, 2048


def _se_weights(acc, wm, wo, c_out, hw):
    """Pooled sum (C, tile) -> per-channel pair-softmax weights (wa, wb), each (C, 1)."""
    pooled = jnp.sum(acc, axis=1, keepdims=True) * (1.0 / hw)   # AdaptiveAvgPool2d(1)
    mid = jnp.maximum(
        jnp.dot(wm, pooled, preferred_element_type=jnp.float32), 0.0)
    logits = jnp.dot(wo, mid, preferred_element_type=jnp.float32)  # (2C, 1), even/odd stacked
    a = jax.nn.sigmoid(logits[:c_out])
    b = jax.nn.sigmoid(logits[c_out:])
    m = jnp.maximum(a, b)
    ea = jnp.exp(a - m)
    eb = jnp.exp(b - m)
    inv = 1.0 / (ea + eb)   # exact: runs once per batch over C values only
    return ea * inv, eb * inv


# --------------------------------------------------------------------------
# fused single-pass kernel: stage features in VMEM, pool, SE weights, blend
# --------------------------------------------------------------------------
def _fused_kernel(x2_ref, x3_ref, w1_ref, b1_ref, w2_ref, b2_ref, wm_ref, wo_ref,
                  o_ref, f2_st, f3_st, acc_ref,
                  *, c_out, hw, tile, mask_last):
    t = pl.program_id(1)
    last = pl.num_programs(1) - 1

    @pl.when(t == 0)
    def _():
        acc_ref[...] = jnp.zeros_like(acc_ref)

    x2 = x2_ref[0]                                        # (C2d, T), input dtype
    x3 = x3_ref[0]                                        # (C3d, T)

    # 1x1 conv == channel-mixing matmul (weights on LHS), f32 accumulate.
    f2 = _leaky_relu(
        jnp.dot(w1_ref[...], x2, preferred_element_type=jnp.float32) + b1_ref[...])
    f3 = _leaky_relu(
        jnp.dot(w2_ref[...], x3, preferred_element_type=jnp.float32) + b2_ref[...])

    start = t * tile
    if tile % 128 == 0:
        start = pl.multiple_of(start, 128)
    f2_st[:, pl.ds(start, tile)] = f2.astype(f2_st.dtype)
    f3_st[:, pl.ds(start, tile)] = f3.astype(f3_st.dtype)

    s = f2 + f3                                           # (C, T) f32
    if mask_last:
        @pl.when(t == last)
        def _():
            col = jax.lax.broadcasted_iota(jnp.int32, s.shape, 1) + t * tile
            acc_ref[...] += jnp.where(col < hw, s, 0.0)

        @pl.when(t != last)
        def _():
            acc_ref[...] += s
    else:
        acc_ref[...] += s

    @pl.when(t == last)
    def _():
        wa, wb = _se_weights(acc_ref[...], wm_ref[...], wo_ref[...], c_out, hw)
        f2_full = f2_st[:, :hw].astype(jnp.float32)
        f3_full = f3_st[:, :hw].astype(jnp.float32)
        o_ref[0] = (f2_full * wa + f3_full * wb).astype(o_ref.dtype)


# --------------------------------------------------------------------------
# two-pass fallback, pass 1: pooled SE weights (B, 2C, 1)
# --------------------------------------------------------------------------
def _pool_weights_kernel(x2_ref, x3_ref, w1_ref, b1_ref, w2_ref, b2_ref,
                         wm_ref, wo_ref, w12_ref, acc_ref,
                         *, c_out, hw, tile, mask_last):
    t = pl.program_id(1)
    last = pl.num_programs(1) - 1

    @pl.when(t == 0)
    def _():
        acc_ref[...] = jnp.zeros_like(acc_ref)

    x2 = x2_ref[0]
    x3 = x3_ref[0]
    f2 = jnp.dot(w1_ref[...], x2, preferred_element_type=jnp.float32) + b1_ref[...]
    f3 = jnp.dot(w2_ref[...], x3, preferred_element_type=jnp.float32) + b2_ref[...]
    s = _leaky_relu(f2) + _leaky_relu(f3)                 # (C, T) f32

    if mask_last:
        @pl.when(t == last)
        def _():
            col = jax.lax.broadcasted_iota(jnp.int32, s.shape, 1) + t * tile
            acc_ref[...] += jnp.where(col < hw, s, 0.0)

        @pl.when(t != last)
        def _():
            acc_ref[...] += s
    else:
        acc_ref[...] += s

    @pl.when(t == last)
    def _():
        wa, wb = _se_weights(acc_ref[...], wm_ref[...], wo_ref[...], c_out, hw)
        w12_ref[0] = jnp.concatenate([wa, wb], axis=0)


# --------------------------------------------------------------------------
# two-pass fallback, pass 2: recompute features per tile and blend
# --------------------------------------------------------------------------
def _apply_kernel(w12_ref, x2_ref, x3_ref, w1_ref, b1_ref, w2_ref, b2_ref,
                  o_ref, *, c_out):
    x2 = x2_ref[0]
    x3 = x3_ref[0]
    f2 = _leaky_relu(
        jnp.dot(w1_ref[...], x2, preferred_element_type=jnp.float32) + b1_ref[...])
    f3 = _leaky_relu(
        jnp.dot(w2_ref[...], x3, preferred_element_type=jnp.float32) + b2_ref[...])
    w12 = w12_ref[0]                                      # (2C, 1) f32
    wa = w12[:c_out]
    wb = w12[c_out:]
    o_ref[0] = (f2 * wa + f3 * wb).astype(o_ref.dtype)    # lane-dense (C, T) store


# --------------------------------------------------------------------------
# wrapper
# --------------------------------------------------------------------------
def skfusion_forward(feat_2d, feat_3d, params, *, tile_hint=None,
                     force_two_pass=False):
    """feat_2d: (B, C2d, H, W), feat_3d: (B, C3d, H, W)  ->  (B, C, H, W)."""
    B, C2d, H, W = feat_2d.shape
    _, C3d, _, _ = feat_3d.shape
    HW = H * W

    w1 = params["align1_w"]        # (C, C2d)
    b1 = params["align1_b"]        # (C,)
    w2 = params["align2_w"]        # (C, C3d)
    b2 = params["align2_b"]        # (C,)
    wm = params["fc_mid_w"]        # (Cmid, C)
    wo = params["fc_out_w"]        # (2C, Cmid)
    C = w1.shape[0]
    in_dtype = feat_2d.dtype
    itemsize = jnp.dtype(in_dtype).itemsize

    vmem_ceiling, default_hint = _vmem_budget()
    if tile_hint is None:
        tile_hint = default_hint

    # NCHW-native: only flatten spatial (free reshape, no NHWC transpose passes,
    # no padding -> no extra HBM read/write passes).
    x2 = feat_2d.reshape(B, C2d, HW)
    x3 = feat_3d.reshape(B, C3d, HW)

    # MXU feed in the input dtype (bf16 stays bf16); f32 bias / FC path.
    w1_k = w1.astype(in_dtype)
    w2_k = w2.astype(in_dtype)
    b1_k = b1.reshape(C, 1).astype(jnp.float32)
    b2_k = b2.reshape(C, 1).astype(jnp.float32)
    wm_k = wm.astype(jnp.float32)
    # fc_out rows interleave the per-channel (w1, w2) logits: stack even/odd rows.
    wo_k = jnp.concatenate([wo[0::2, :], wo[1::2, :]], axis=0).astype(jnp.float32)

    weight_bytes = (2 * (w1_k.size + w2_k.size) * itemsize
                    + 2 * (b1_k.size + b2_k.size + wm_k.size + wo_k.size + 2 * C) * 4)

    def two_pass_bytes(tile):
        return (2 * (C2d + C3d) * tile * itemsize    # double-buffered streamed inputs
                + 2 * C * tile * itemsize            # double-buffered streamed output
                + C * tile * 4                       # lane-dense pooled-sum accumulator
                + 6 * C * tile * 4                   # f32 intermediates headroom
                + weight_bytes)

    def fused_bytes(tile, n_t):
        return (2 * (C2d + C3d) * tile * itemsize    # double-buffered streamed inputs
                + 2 * C * HW * itemsize              # double-buffered resident output block
                + 2 * C * n_t * tile * itemsize      # f2 / f3 staging scratch
                + C * tile * 4                       # pooled-sum accumulator
                + 8 * C * tile * 4                   # f32 intermediates headroom
                + weight_bytes)

    # ---- spatial tile choice: big lane tile, no HBM padding, ragged last block ----
    tile = _round_up(max(int(tile_hint), 128), 128)
    while tile > 128 and two_pass_bytes(tile) > vmem_ceiling:
        tile = max(128, _round_up(tile // 2, 128))
    if tile >= HW:
        tile = HW                      # single full-width block (full-dim, no 128 rule)
    n_t = pl.cdiv(HW, tile)
    mask_last = (HW % tile) != 0       # ragged last block: mask pooling only

    def full(arr):
        n = arr.ndim
        return pl.BlockSpec(arr.shape, lambda b, t, _n=n: (0,) * _n)

    def vlimit(est):
        return int(min(vmem_ceiling, max(2 * est + (4 << 20), 16 << 20)))

    use_fused = (not force_two_pass) and fused_bytes(tile, n_t) <= vmem_ceiling

    if use_fused:
        # ---- single pass: stage features in VMEM, pool, SE weights, blend ----
        out = pl.pallas_call(
            functools.partial(_fused_kernel, c_out=C, hw=HW, tile=tile,
                              mask_last=mask_last),
            out_shape=jax.ShapeDtypeStruct((B, C, HW), in_dtype),
            grid_spec=pltpu.PrefetchScalarGridSpec(
                num_scalar_prefetch=0,
                grid=(B, n_t),
                in_specs=[
                    pl.BlockSpec((1, C2d, tile), lambda b, t: (b, 0, t)),
                    pl.BlockSpec((1, C3d, tile), lambda b, t: (b, 0, t)),
                    full(w1_k), full(b1_k), full(w2_k), full(b2_k),
                    full(wm_k), full(wo_k),
                ],
                out_specs=pl.BlockSpec((1, C, HW), lambda b, t: (b, 0, 0)),
                scratch_shapes=[
                    pltpu.VMEM((C, n_t * tile), in_dtype),   # staged f2
                    pltpu.VMEM((C, n_t * tile), in_dtype),   # staged f3
                    pltpu.VMEM((C, tile), jnp.float32),      # lane-dense pooled sum
                ],
            ),
            compiler_params=pltpu.CompilerParams(
                dimension_semantics=("parallel", "arbitrary"),
                vmem_limit_bytes=vlimit(fused_bytes(tile, n_t)),
            ),
        )(x2, x3, w1_k, b1_k, w2_k, b2_k, wm_k, wo_k)
        return out.reshape(B, C, H, W)

    # ---- two-pass fallback (features too large for VMEM staging) ----
    w12 = pl.pallas_call(
        functools.partial(_pool_weights_kernel, c_out=C, hw=HW, tile=tile,
                          mask_last=mask_last),
        out_shape=jax.ShapeDtypeStruct((B, 2 * C, 1), jnp.float32),
        grid_spec=pltpu.PrefetchScalarGridSpec(
            num_scalar_prefetch=0,
            grid=(B, n_t),
            in_specs=[
                pl.BlockSpec((1, C2d, tile), lambda b, t: (b, 0, t)),
                pl.BlockSpec((1, C3d, tile), lambda b, t: (b, 0, t)),
                full(w1_k), full(b1_k), full(w2_k), full(b2_k),
                full(wm_k), full(wo_k),
            ],
            out_specs=pl.BlockSpec((1, 2 * C, 1), lambda b, t: (b, 0, 0)),
            scratch_shapes=[pltpu.VMEM((C, tile), jnp.float32)],
        ),
        compiler_params=pltpu.CompilerParams(
            dimension_semantics=("parallel", "arbitrary"),
            vmem_limit_bytes=vlimit(two_pass_bytes(tile)),
        ),
    )(x2, x3, w1_k, b1_k, w2_k, b2_k, wm_k, wo_k)

    out = pl.pallas_call(
        functools.partial(_apply_kernel, c_out=C),
        out_shape=jax.ShapeDtypeStruct((B, C, HW), in_dtype),
        grid_spec=pltpu.PrefetchScalarGridSpec(
            num_scalar_prefetch=0,
            grid=(B, n_t),
            in_specs=[
                pl.BlockSpec((1, 2 * C, 1), lambda b, t: (b, 0, 0)),
                pl.BlockSpec((1, C2d, tile), lambda b, t: (b, 0, t)),
                pl.BlockSpec((1, C3d, tile), lambda b, t: (b, 0, t)),
                full(w1_k), full(b1_k), full(w2_k), full(b2_k),
            ],
            out_specs=pl.BlockSpec((1, C, tile), lambda b, t: (b, 0, t)),
        ),
        compiler_params=pltpu.CompilerParams(
            dimension_semantics=("parallel", "parallel"),
            vmem_limit_bytes=vlimit(two_pass_bytes(tile)),
        ),
    )(w12, x2, x3, w1_k, b1_k, w2_k, b2_k)
    return out.reshape(B, C, H, W)


def init_params(key, in_channels_2d, in_channels_3d, out_channels, reduction=1):
    C = out_channels
    Cmid = out_channels // reduction
    ks = jax.random.split(key, 6)
    scale = 0.1
    return {
        "align1_w": scale * jax.random.normal(ks[0], (C, in_channels_2d), jnp.float32),
        "align1_b": scale * jax.random.normal(ks[1], (C,), jnp.float32),
        "align2_w": scale * jax.random.normal(ks[2], (C, in_channels_3d), jnp.float32),
        "align2_b": scale * jax.random.normal(ks[3], (C,), jnp.float32),
        "fc_mid_w": scale * jax.random.normal(ks[4], (Cmid, C), jnp.float32),
        "fc_out_w": scale * jax.random.normal(ks[5], (2 * C, Cmid), jnp.float32),
    }


def _reference(feat_2d, feat_3d, params):
    # pure-JAX reference of the PyTorch forward, for a sanity check
    B = feat_2d.shape[0]
    f2 = jnp.einsum("bchw,oc->bohw", feat_2d, params["align1_w"]) \
        + params["align1_b"][None, :, None, None]
    f2 = jnp.where(f2 > 0, f2, 0.1 * f2)
    f3 = jnp.einsum("bchw,oc->bohw", feat_3d, params["align2_w"]) \
        + params["align2_b"][None, :, None, None]
    f3 = jnp.where(f3 > 0, f3, 0.1 * f3)
    w = jnp.mean(f2 + f3, axis=(2, 3))                       # (B, C)
    w = jnp.maximum(w @ params["fc_mid_w"].T, 0.0)
    w = jax.nn.sigmoid(w @ params["fc_out_w"].T).reshape(B, -1, 2)
    w = jax.nn.softmax(w, axis=-1)
    w1 = w[..., 0][:, :, None, None]
    w2 = w[..., 1][:, :, None, None]
    return f2 * w1 + f3 * w2


if __name__ == "__main__":
    key = jax.random.PRNGKey(0)
    k_in2, k_in3, k_par, k_in2b, k_in3b = jax.random.split(key, 5)

    # Case 1: small spatial -> single full-width block, fused single-pass path.
    B, C2d, C3d, C, H, W = 2, 4, 6, 8, 16, 16
    feat_2d = jax.random.normal(k_in2, (B, C2d, H, W), jnp.float32)
    feat_3d = jax.random.normal(k_in3, (B, C3d, H, W), jnp.float32)
    params = init_params(k_par, C2d, C3d, C, reduction=1)

    out = jax.block_until_ready(skfusion_forward(feat_2d, feat_3d, params))
    ref = jax.block_until_ready(_reference(feat_2d, feat_3d, params))
    assert out.shape == (B, C, H, W)
    assert jnp.allclose(out, ref, atol=1e-5, rtol=1e-5)

    # Case 2: ragged spatial tiling (HW % tile != 0), forced two-pass fallback.
    H2, W2 = 10, 13            # HW = 130, tile forced to 128 -> ragged last block
    feat_2d_b = jax.random.normal(k_in2b, (B, C2d, H2, W2), jnp.float32)
    feat_3d_b = jax.random.normal(k_in3b, (B, C3d, H2, W2), jnp.float32)
    ref_b = jax.block_until_ready(_reference(feat_2d_b, feat_3d_b, params))

    out_b = jax.block_until_ready(
        skfusion_forward(feat_2d_b, feat_3d_b, params,
                         tile_hint=128, force_two_pass=True))
    assert out_b.shape == (B, C, H2, W2)
    assert jnp.allclose(out_b, ref_b, atol=1e-5, rtol=1e-5)

    # Case 3: ragged spatial tiling through the fused single-pass path.
    out_c = jax.block_until_ready(
        skfusion_forward(feat_2d_b, feat_3d_b, params, tile_hint=128))
    assert jnp.allclose(out_c, ref_b, atol=1e-5, rtol=1e-5)

    print("KERNEL_OK")
</pallas_src>

<mosaic_0001>
module attributes {stable_mosaic.version = 11 : i64} {
  func.func @_fused_kernel(%arg0: i32, %arg1: i32, %arg2: memref<1x4x256xf32, #tpu.memory_space<vmem>>, %arg3: memref<1x6x256xf32, #tpu.memory_space<vmem>>, %arg4: memref<8x4xf32, #tpu.memory_space<vmem>>, %arg5: memref<8x1xf32, #tpu.memory_space<vmem>>, %arg6: memref<8x6xf32, #tpu.memory_space<vmem>>, %arg7: memref<8x1xf32, #tpu.memory_space<vmem>>, %arg8: memref<8x8xf32, #tpu.memory_space<vmem>>, %arg9: memref<16x8xf32, #tpu.memory_space<vmem>>, %arg10: memref<1x8x256xf32, #tpu.memory_space<vmem>>, %arg11: memref<8x256xf32, #tpu.memory_space<vmem>>, %arg12: memref<8x256xf32, #tpu.memory_space<vmem>>, %arg13: memref<8x256xf32, #tpu.memory_space<vmem>>) attributes {dimension_semantics = [#tpu.dimension_semantics<parallel>, #tpu.dimension_semantics<arbitrary>], iteration_bounds = array<i64: 2, 1>, scalar_prefetch = 0 : i64, scratch_operands = 3 : i64, tpu.core_type = #tpu.core_type<tc>, window_params = [{transform_indices = @transform_0, window_bounds = array<i64: 1, 4, 256>}, {transform_indices = @transform_1, window_bounds = array<i64: 1, 6, 256>}, {pipeline_mode = #tpu.pipeline_mode<synchronous>, transform_indices = @transform_2, window_bounds = array<i64: 8, 4>}, {pipeline_mode = #tpu.pipeline_mode<synchronous>, transform_indices = @transform_3, window_bounds = array<i64: 8, 1>}, {pipeline_mode = #tpu.pipeline_mode<synchronous>, transform_indices = @transform_4, window_bounds = array<i64: 8, 6>}, {pipeline_mode = #tpu.pipeline_mode<synchronous>, transform_indices = @transform_5, window_bounds = array<i64: 8, 1>}, {pipeline_mode = #tpu.pipeline_mode<synchronous>, transform_indices = @transform_6, window_bounds = array<i64: 8, 8>}, {pipeline_mode = #tpu.pipeline_mode<synchronous>, transform_indices = @transform_7, window_bounds = array<i64: 16, 8>}, {transform_indices = @transform_8, window_bounds = array<i64: 1, 8, 256>}]} {
    %c0_i32 = arith.constant 0 : i32
    %0 = arith.cmpi eq, %arg1, %c0_i32 : i32
    %1 = arith.extui %0 : i1 to i32
    %c0_i32_0 = arith.constant 0 : i32
    %2 = arith.cmpi ne, %1, %c0_i32_0 : i32
    scf.if %2 {
      %cst_27 = arith.constant 0.000000e+00 : f32
      %40 = vector.broadcast %cst_27 : f32 to vector<8x256xf32>
      %c0_28 = arith.constant 0 : index
      %c0_29 = arith.constant 0 : index
      %41 = vector.load %arg13[%c0_28, %c0_29] : memref<8x256xf32, #tpu.memory_space<vmem>>, vector<8x256xf32>
      tpu.vector_store %arg13[%c0_28, %c0_29], %40 {strides = array<i32>} : memref<8x256xf32, #tpu.memory_space<vmem>>, vector<8x256xf32>,
    } else {
    }
    %c0 = arith.constant 0 : index
    %c0_1 = arith.constant 0 : index
    %c0_2 = arith.constant 0 : index
    %3 = vector.load %arg2[%c0, %c0_1, %c0_2] : memref<1x4x256xf32, #tpu.memory_space<vmem>>, vector<1x4x256xf32>
    %4 = vector.shape_cast %3 : vector<1x4x256xf32> to vector<4x256xf32>
    %c0_3 = arith.constant 0 : index
    %c0_4 = arith.constant 0 : index
    %c0_5 = arith.constant 0 : index
    %5 = vector.load %arg3[%c0_3, %c0_4, %c0_5] : memref<1x6x256xf32, #tpu.memory_space<vmem>>, vector<1x6x256xf32>
    %6 = vector.shape_cast %5 : vector<1x6x256xf32> to vector<6x256xf32>
    %c0_6 = arith.constant 0 : index
    %c0_7 = arith.constant 0 : index
    %7 = vector.load %arg4[%c0_6, %c0_7] : memref<8x4xf32, #tpu.memory_space<vmem>>, vector<8x4xf32>
    %cst = arith.constant dense<0.000000e+00> : vector<8x256xf32>
    %8 = tpu.matmul %7, %4, %cst {dimension_numbers = #tpu.dot_dimension_numbers<[1], [0], [0], [1], [0, 0, 1, 1], [], []>} : vector<8x4xf32>, vector<4x256xf32>, vector<8x256xf32> -> vector<8x256xf32>
    %c0_8 = arith.constant 0 : index
    %c0_9 = arith.constant 0 : index
    %9 = vector.load %arg5[%c0_8, %c0_9] : memref<8x1xf32, #tpu.memory_space<vmem>>, vector<8x1xf32>
    %10 = vector.broadcast %9 : vector<8x1xf32> to vector<8x256xf32>
    %11 = arith.addf %8, %10 : vector<8x256xf32>
    %cst_10 = arith.constant 0.000000e+00 : f32
    %12 = vector.broadcast %cst_10 : f32 to vector<8x256xf32>
    %13 = arith.cmpf ogt, %11, %12 : vector<8x256xf32>
    %cst_11 = arith.constant 1.000000e-01 : f32
    %14 = vector.broadcast %cst_11 : f32 to vector<8x256xf32>
    %15 = arith.mulf %14, %11 : vector<8x256xf32>
    %16 = arith.select %13, %11, %15 : vector<8x256xi1>, vector<8x256xf32>
    %c0_12 = arith.constant 0 : index
    %c0_13 = arith.constant 0 : index
    %17 = vector.load %arg6[%c0_12, %c0_13] : memref<8x6xf32, #tpu.memory_space<vmem>>, vector<8x6xf32>
    %cst_14 = arith.constant dense<0.000000e+00> : vector<8x256xf32>
    %18 = tpu.matmul %17, %6, %cst_14 {dimension_numbers = #tpu.dot_dimension_numbers<[1], [0], [0], [1], [0, 0, 1, 1], [], []>} : vector<8x6xf32>, vector<6x256xf32>, vector<8x256xf32> -> vector<8x256xf32>
    %c0_15 = arith.constant 0 : index
    %c0_16 = arith.constant 0 : index
    %19 = vector.load %arg7[%c0_15, %c0_16] : memref<8x1xf32, #tpu.memory_space<vmem>>, vector<8x1xf32>
    %20 = vector.broadcast %19 : vector<8x1xf32> to vector<8x256xf32>
    %21 = arith.addf %18, %20 : vector<8x256xf32>
    %cst_17 = arith.constant 0.000000e+00 : f32
    %22 = vector.broadcast %cst_17 : f32 to vector<8x256xf32>
    %23 = arith.cmpf ogt, %21, %22 : vector<8x256xf32>
    %cst_18 = arith.constant 1.000000e-01 : f32
    %24 = vector.broadcast %cst_18 : f32 to vector<8x256xf32>
    %25 = arith.mulf %24, %21 : vector<8x256xf32>
    %26 = arith.select %23, %21, %25 : vector<8x256xi1>, vector<8x256xf32>
    %c256_i32 = arith.constant 256 : i32
    %27 = arith.muli %arg1, %c256_i32 : i32
    %28 = tpu.assume_multiple %27, 128 : i32
    %c0_19 = arith.constant 0 : index
    %29 = arith.index_cast %28 : i32 to index
    %30 = vector.load %arg11[%c0_19, %29] : memref<8x256xf32, #tpu.memory_space<vmem>>, vector<8x256xf32>
    tpu.vector_store %arg11[%c0_19, %29], %16 {strides = array<i32>} : memref<8x256xf32, #tpu.memory_space<vmem>>, vector<8x256xf32>,
    %c0_20 = arith.constant 0 : index
    %31 = arith.index_cast %28 : i32 to index
    %32 = vector.load %arg12[%c0_20, %31] : memref<8x256xf32, #tpu.memory_space<vmem>>, vector<8x256xf32>
    tpu.vector_store %arg12[%c0_20, %31], %26 {strides = array<i32>} : memref<8x256xf32, #tpu.memory_space<vmem>>, vector<8x256xf32>,
    %33 = arith.addf %16, %26 : vector<8x256xf32>
    %c0_21 = arith.constant 0 : index
    %c0_22 = arith.constant 0 : index
    %34 = vector.load %arg13[%c0_21, %c0_22] : memref<8x256xf32, #tpu.memory_space<vmem>>, vector<8x256xf32>
    %35 = arith.addf %34, %33 : vector<8x256xf32>
    %c0_23 = arith.constant 0 : index
    %c0_24 = arith.constant 0 : index
    %36 = vector.load %arg13[%c0_23, %c0_24] : memref<8x256xf32, #tpu.memory_space<vmem>>, vector<8x256xf32>
    tpu.vector_store %arg13[%c0_23, %c0_24], %35 {strides = array<i32>} : memref<8x256xf32, #tpu.memory_space<vmem>>, vector<8x256xf32>,
    %c0_i32_25 = arith.constant 0 : i32
    %37 = arith.cmpi eq, %arg1, %c0_i32_25 : i32
    %38 = arith.extui %37 : i1 to i32
    %c0_i32_26 = arith.constant 0 : i32
    %39 = arith.cmpi ne, %38, %c0_i32_26 : i32
    scf.if %39 {
      %c0_27 = arith.constant 0 : index
      %c0_28 = arith.constant 0 : index
      %40 = vector.load %arg13[%c0_27, %c0_28] : memref<8x256xf32, #tpu.memory_space<vmem>>, vector<8x256xf32>
      %c0_29 = arith.constant 0 : index
      %c0_30 = arith.constant 0 : index
      %41 = vector.load %arg8[%c0_29, %c0_30] : memref<8x8xf32, #tpu.memory_space<vmem>>, vector<8x8xf32>
      %c0_31 = arith.constant 0 : index
      %c0_32 = arith.constant 0 : index
      %42 = vector.load %arg9[%c0_31, %c0_32] : memref<16x8xf32, #tpu.memory_space<vmem>>, vector<16x8xf32>
      %cst_33 = arith.constant dense<0.000000e+00> : vector<8xf32>
      %43 = vector.multi_reduction <add>, %40, %cst_33 [1] : vector<8x256xf32> to vector<8xf32>
      %44 = vector.shape_cast %43 : vector<8xf32> to vector<8x1xf32>
      %cst_34 = arith.constant 3.906250e-03 : f32
      %45 = vector.broadcast %cst_34 : f32 to vector<8x1xf32>
      %46 = arith.mulf %44, %45 : vector<8x1xf32>
      %cst_35 = arith.constant dense<0.000000e+00> : vector<8x1xf32>
      %47 = tpu.matmul %41, %46, %cst_35 {dimension_numbers = #tpu.dot_dimension_numbers<[1], [0], [0], [1], [0, 0, 1, 1], [], []>} : vector<8x8xf32>, vector<8x1xf32>, vector<8x1xf32> -> vector<8x1xf32>
      %cst_36 = arith.constant 0.000000e+00 : f32
      %48 = vector.broadcast %cst_36 : f32 to vector<8x1xf32>
      %49 = arith.maximumf %47, %48 : vector<8x1xf32>
      %cst_37 = arith.constant dense<0.000000e+00> : vector<16x1xf32>
      %50 = tpu.matmul %42, %49, %cst_37 {dimension_numbers = #tpu.dot_dimension_numbers<[1], [0], [0], [1], [0, 0, 1, 1], [], []>} : vector<16x8xf32>, vector<8x1xf32>, vector<16x1xf32> -> vector<16x1xf32>
      %51 = vector.extract_strided_slice %50 {offsets = [0, 0], sizes = [8, 1], strides = [1, 1]} : vector<16x1xf32> to vector<8x1xf32>
      %52 = arith.negf %51 : vector<8x1xf32>
      %53 = math.exp %52 : vector<8x1xf32>
      %cst_38 = arith.constant 1.000000e+00 : f32
      %54 = vector.broadcast %cst_38 : f32 to vector<8x1xf32>
      %55 = arith.addf %54, %53 : vector<8x1xf32>
      %56 = arith.divf %54, %55 : vector<8x1xf32>
      %57 = vector.extract_strided_slice %50 {offsets = [8, 0], sizes = [8, 1], strides = [1, 1]} : vector<16x1xf32> to vector<8x1xf32>
      %58 = arith.negf %57 : vector<8x1xf32>
      %59 = math.exp %58 : vector<8x1xf32>
      %cst_39 = arith.constant 1.000000e+00 : f32
      %60 = vector.broadcast %cst_39 : f32 to vector<8x1xf32>
      %61 = arith.addf %60, %59 : vector<8x1xf32>
      %62 = arith.divf %60, %61 : vector<8x1xf32>
      %63 = arith.maximumf %56, %62 : vector<8x1xf32>
      %64 = arith.subf %56, %63 : vector<8x1xf32>
      %65 = math.exp %64 : vector<8x1xf32>
      %66 = arith.subf %62, %63 : vector<8x1xf32>
      %67 = math.exp %66 : vector<8x1xf32>
      %68 = arith.addf %65, %67 : vector<8x1xf32>
      %cst_40 = arith.constant 1.000000e+00 : f32
      %69 = vector.broadcast %cst_40 : f32 to vector<8x1xf32>
      %70 = arith.divf %69, %68 : vector<8x1xf32>
      %71 = arith.mulf %65, %70 : vector<8x1xf32>
      %72 = arith.mulf %67, %70 : vector<8x1xf32>
      %c0_41 = arith.constant 0 : index
      %c0_42 = arith.constant 0 : index
      %73 = vector.load %arg11[%c0_41, %c0_42] : memref<8x256xf32, #tpu.memory_space<vmem>>, vector<8x256xf32>
      %c0_43 = arith.constant 0 : index
      %c0_44 = arith.constant 0 : index
      %74 = vector.load %arg12[%c0_43, %c0_44] : memref<8x256xf32, #tpu.memory_space<vmem>>, vector<8x256xf32>
      %75 = vector.broadcast %71 : vector<8x1xf32> to vector<8x256xf32>
      %76 = arith.mulf %73, %75 : vector<8x256xf32>
      %77 = vector.broadcast %72 : vector<8x1xf32> to vector<8x256xf32>
      %78 = arith.mulf %74, %77 : vector<8x256xf32>
      %79 = arith.addf %76, %78 : vector<8x256xf32>
      %c0_45 = arith.constant 0 : index
      %c0_46 = arith.constant 0 : index
      %c0_47 = arith.constant 0 : index
      %80 = vector.load %arg10[%c0_45, %c0_46, %c0_47] : memref<1x8x256xf32, #tpu.memory_space<vmem>>, vector<1x8x256xf32>
      %81 = vector.shape_cast %80 : vector<1x8x256xf32> to vector<8x256xf32>
      %82 = vector.shape_cast %79 : vector<8x256xf32> to vector<1x8x256xf32>
      tpu.vector_store %arg10[%c0_45, %c0_46, %c0_47], %82 {strides = array<i32>} : memref<1x8x256xf32, #tpu.memory_space<vmem>>, vector<1x8x256xf32>,
    } else {
    }
    return
  }
  func.func @transform_0(%arg0: i32, %arg1: i32) -> (i32, i32, i32) {
    %c0_i32 = arith.constant 0 : i32
    %c0_i32_0 = arith.constant 0 : i32
    return %arg0, %c0_i32, %arg1 : i32, i32, i32
  }
  func.func @transform_1(%arg0: i32, %arg1: i32) -> (i32, i32, i32) {
    %c0_i32 = arith.constant 0 : i32
    %c0_i32_0 = arith.constant 0 : i32
    return %arg0, %c0_i32, %arg1 : i32, i32, i32
  }
  func.func @transform_2(%arg0: i32, %arg1: i32) -> (i32, i32) {
    %c0_i32 = arith.constant 0 : i32
    %c0_i32_0 = arith.constant 0 : i32
    %c0_i32_1 = arith.constant 0 : i32
    return %c0_i32, %c0_i32_0 : i32, i32
  }
  func.func @transform_3(%arg0: i32, %arg1: i32) -> (i32, i32) {
    %c0_i32 = arith.constant 0 : i32
    %c0_i32_0 = arith.constant 0 : i32
    %c0_i32_1 = arith.constant 0 : i32
    return %c0_i32, %c0_i32_0 : i32, i32
  }
  func.func @transform_4(%arg0: i32, %arg1: i32) -> (i32, i32) {
    %c0_i32 = arith.constant 0 : i32
    %c0_i32_0 = arith.constant 0 : i32
    %c0_i32_1 = arith.constant 0 : i32
    return %c0_i32, %c0_i32_0 : i32, i32
  }
  func.func @transform_5(%arg0: i32, %arg1: i32) -> (i32, i32) {
    %c0_i32 = arith.constant 0 : i32
    %c0_i32_0 = arith.constant 0 : i32
    %c0_i32_1 = arith.constant 0 : i32
    return %c0_i32, %c0_i32_0 : i32, i32
  }
  func.func @transform_6(%arg0: i32, %arg1: i32) -> (i32, i32) {
    %c0_i32 = arith.constant 0 : i32
    %c0_i32_0 = arith.constant 0 : i32
    %c0_i32_1 = arith.constant 0 : i32
    return %c0_i32, %c0_i32_0 : i32, i32
  }
  func.func @transform_7(%arg0: i32, %arg1: i32) -> (i32, i32) {
    %c0_i32 = arith.constant 0 : i32
    %c0_i32_0 = arith.constant 0 : i32
    %c0_i32_1 = arith.constant 0 : i32
    return %c0_i32, %c0_i32_0 : i32, i32
  }
  func.func @transform_8(%arg0: i32, %arg1: i32) -> (i32, i32, i32) {
    %c0_i32 = arith.constant 0 : i32
    %c0_i32_0 = arith.constant 0 : i32
    %c0_i32_1 = arith.constant 0 : i32
    return %arg0, %c0_i32, %c0_i32_0 : i32, i32, i32
  }
}

</mosaic_0001>

<llo_original>
// kernel: tpu_custom_call.1
$region0: #{tpu_custom_call.1}
  #allocation0 [shape = 'u32[]', space=smem, size = 0x4, offset = 0x4, fixed_abs, tag = 'smem constant byte address 0x4 - core index']
  #allocation1 [shape = 'u32[144,128]{1,0:T(1,128)}', space=vmem, size = 0x12000, scoped, tag = 'internal scratch']
  #allocation2 [shape = 'f32[8,256]{1,0:T(8,128)}', space=vmem, size = 0x2000, scoped, tag = 'scratch operand']
  #allocation3 [shape = 'f32[8,256]{1,0:T(8,128)}', space=vmem, size = 0x2000, scoped, tag = 'scratch operand']
  #allocation4 [shape = 'f32[8,256]{1,0:T(8,128)}', space=vmem, size = 0x2000, scoped, tag = 'scratch operand']
  %s0 = inlined_call_operand.vmem [shape: f32[2,4,256], index: 0, kind: input, shape index: {}]
  %s1 = inlined_call_operand.vmem [shape: f32[2,6,256], index: 1, kind: input, shape index: {}]
  %s2 = inlined_call_operand.vmem [shape: f32[8,4], index: 2, kind: input, shape index: {}]
  %s3 = inlined_call_operand.vmem [shape: f32[8,1], index: 3, kind: input, shape index: {}]
  %s4 = inlined_call_operand.vmem [shape: f32[8,6], index: 4, kind: input, shape index: {}]
  %s5 = inlined_call_operand.vmem [shape: f32[8,1], index: 5, kind: input, shape index: {}]
  %s6 = inlined_call_operand.vmem [shape: f32[8,8], index: 6, kind: input, shape index: {}]
  %s7 = inlined_call_operand.vmem [shape: f32[16,8], index: 7, kind: input, shape index: {}]
  %s8 = inlined_call_operand.hbm [shape: f32[2,8,256], index: 8, kind: output, shape index: {}]
  %s9 = sld [smem:[#allocation0]]
  $region73: #{tpu_custom_call.1} parent=0
    _
  %s11 = ssub.s32 1, %s9
  %s12 = scalar_select 0, %s11, %s9
  $region1: #{tpu_custom_call.1} parent=0
    #allocation5 [shape = 'u8[16384]{0}', space=vmem, size = 0x4000, scoped, tag = 'output window, operand 0']
    #allocation6 [shape = 's32[2]{0}', space=sflag, size = 0x8, scoped, tag = 'scoped memory for tpu_custom_call.1']
    %13 = vsyncpa [#allocation6], 0
    %s14 = scalar_lea.sflag [#allocation6], 1
    %15 = vsyncpa %s14, 0
    loop: start=0, step=1, limit=4
    $region2: #{tpu_custom_call.1} parent=1 // loop_pre_header
      _
    $region3: #{tpu_custom_call.1} parent=1 // loop_header
      %s17 = sphi 0, %s21
      %p18 = scmp.ge.s32.totalorder %s17, 4
      %s24 = sphi 0, %s36
      %s25 = sphi 0, %s32
      %s26 = sphi 0, %s24
      %s27 = sphi 0, %s25
      %s28 = sphi 0, %s26
      %s29 = sphi 0, %s27
      %s41 = sphi 0, %s43
      %s44 = sphi 0, %s41
      %s45 = sphi 0, %s44
      %s61 = sphi 0, %s45
      %s69 = sphi 0, %s71
      %s72 = sphi 0, %s69
      %s73 = sphi 0, %s72
      %s89 = sphi 0, %s73
      %s93 = sphi 0, %s93
      %s95 = sphi 0, %s93
      %s96 = sphi 0, %s95
      %s110 = sphi 0, %s96
      %s114 = sphi 0, %s114
      %s116 = sphi 0, %s114
      %s117 = sphi 0, %s116
      %s131 = sphi 0, %s117
      %s135 = sphi 0, %s135
      %s137 = sphi 0, %s135
      %s138 = sphi 0, %s137
      %s152 = sphi 0, %s138
      %s156 = sphi 0, %s156
      %s158 = sphi 0, %s156
      %s159 = sphi 0, %s158
      %s173 = sphi 0, %s159
      %s177 = sphi 0, %s177
      %s179 = sphi 0, %s177
      %s180 = sphi 0, %s179
      %s194 = sphi 0, %s180
      %s198 = sphi 0, %s198
      %s200 = sphi 0, %s198
      %s201 = sphi 0, %s200
      %s215 = sphi 0, %s201
      %s221 = sphi 0, %s223
      %s224 = sphi 0, %s221
      %s225 = sphi 0, %s224
      %s241 = sphi 0, %s225
    $region4: #{tpu_custom_call.1} parent=1 // loop_header_branch
      %20 = sbr.rel (%p18) target = $region8
    $region5: #{tpu_custom_call.1} parent=1 // loop_body
      %s22 = ssub.s32 %s17, 1
      %s23 = ssub.s32 %s17, 2
      %s30 = sadd.s32 1, %s25
      %p31 = scmp.ge.s32.totalorder %s30, 1
      %s32 = scalar_select %p31, 0, %s30
      %s33 = sadd.s32 1, %s24
      %s34 = scalar_select %p31, %s33, %s24
      %p35 = scmp.ge.s32.totalorder %s34, 2
      %s36 = scalar_select %p35, 0, %s34
      %s37 = ssub.s32 %s24, %s36
      %s38 = ssub.s32 %s25, %s32
      %s39 = sor.u32 %s37, %s38
      %p40 = scmp.eq.s32.totalorder %s39, 0
      %s42 = sadd.s32 %s41, 1
      %s43 = scalar_select %p40, %s41, %s42
      %p46 = pneg %p40
      %p47 = scmp.eq.s32.totalorder %s17, 1
      %p48 = por %p46, %p47
      %p49 = scmp.ne.s32.totalorder %s41, %s44
      %p50 = scmp.eq.s32.totalorder %s17, 0
      %p51 = por %p49, %p50
      %p52 = scmp.ne.s32.totalorder %s41, %s44
      %p53 = scmp.eq.s32.totalorder %s22, 1
      %p54 = por %p52, %p53
      %p55 = scmp.ne.s32.totalorder %s44, %s45
      %p56 = scmp.eq.s32.totalorder %s22, 0
      %p57 = por %p55, %p56
      %p58 = scmp.ne.s32.totalorder %s44, %s45
      %p59 = scmp.eq.s32.totalorder %s23, 1
      %p60 = por %p58, %p59
      %p62 = scmp.ne.s32.totalorder %s45, %s61
      %p63 = scmp.eq.s32.totalorder %s23, 0
      %p64 = por %p62, %p63
      %s65 = ssub.s32 %s24, %s36
      %s66 = ssub.s32 %s25, %s32
      %s67 = sor.u32 %s65, %s66
      %p68 = scmp.eq.s32.totalorder %s67, 0
      %s70 = sadd.s32 %s69, 1
      %s71 = scalar_select %p68, %s69, %s70
      %p74 = pneg %p68
      %p75 = scmp.eq.s32.totalorder %s17, 1
      %p76 = por %p74, %p75
      %p77 = scmp.ne.s32.totalorder %s69, %s72
      %p78 = scmp.eq.s32.totalorder %s17, 0
      %p79 = por %p77, %p78
      %p80 = scmp.ne.s32.totalorder %s69, %s72
      %p81 = scmp.eq.s32.totalorder %s22, 1
      %p82 = por %p80, %p81
      %p83 = scmp.ne.s32.totalorder %s72, %s73
      %p84 = scmp.eq.s32.totalorder %s22, 0
      %p85 = por %p83, %p84
      %p86 = scmp.ne.s32.totalorder %s72, %s73
      %p87 = scmp.eq.s32.totalorder %s23, 1
      %p88 = por %p86, %p87
      %p90 = scmp.ne.s32.totalorder %s73, %s89
      %p91 = scmp.eq.s32.totalorder %s23, 0
      %p92 = por %p90, %p91
      %s94 = sadd.s32 %s93, 1
      %p97 = scmp.eq.s32.totalorder %s17, 1
      %p98 = scmp.ne.s32.totalorder %s93, %s95
      %p99 = scmp.eq.s32.totalorder %s17, 0
      %p100 = por %p98, %p99
      %p101 = scmp.ne.s32.totalorder %s93, %s95
      %p102 = scmp.eq.s32.totalorder %s22, 1
      %p103 = por %p101, %p102
      %p104 = scmp.ne.s32.totalorder %s95, %s96
      %p105 = scmp.eq.s32.totalorder %s22, 0
      %p106 = por %p104, %p105
      %p107 = scmp.ne.s32.totalorder %s95, %s96
      %p108 = scmp.eq.s32.totalorder %s23, 1
      %p109 = por %p107, %p108
      %p111 = scmp.ne.s32.totalorder %s96, %s110
      %p112 = scmp.eq.s32.totalorder %s23, 0
      %p113 = por %p111, %p112
      %s115 = sadd.s32 %s114, 1
      %p118 = scmp.eq.s32.totalorder %s17, 1
      %p119 = scmp.ne.s32.totalorder %s114, %s116
      %p120 = scmp.eq.s32.totalorder %s17, 0
      %p121 = por %p119, %p120
      %p122 = scmp.ne.s32.totalorder %s114, %s116
      %p123 = scmp.eq.s32.totalorder %s22, 1
      %p124 = por %p122, %p123
      %p125 = scmp.ne.s32.totalorder %s116, %s117
      %p126 = scmp.eq.s32.totalorder %s22, 0
      %p127 = por %p125, %p126
      %p128 = scmp.ne.s32.totalorder %s116, %s117
      %p129 = scmp.eq.s32.totalorder %s23, 1
      %p130 = por %p128, %p129
      %p132 = scmp.ne.s32.totalorder %s117, %s131
      %p133 = scmp.eq.s32.totalorder %s23, 0
      %p134 = por %p132, %p133
      %s136 = sadd.s32 %s135, 1
      %p139 = scmp.eq.s32.totalorder %s17, 1
      %p140 = scmp.ne.s32.totalorder %s135, %s137
      %p141 = scmp.eq.s32.totalorder %s17, 0
      %p142 = por %p140, %p141
      %p143 = scmp.ne.s32.totalorder %s135, %s137
      %p144 = scmp.eq.s32.totalorder %s22, 1
      %p145 = por %p143, %p144
      %p146 = scmp.ne.s32.totalorder %s137, %s138
      %p147 = scmp.eq.s32.totalorder %s22, 0
      %p148 = por %p146, %p147
      %p149 = scmp.ne.s32.totalorder %s137, %s138
      %p150 = scmp.eq.s32.totalorder %s23, 1
      %p151 = por %p149, %p150
      %p153 = scmp.ne.s32.totalorder %s138, %s152
      %p154 = scmp.eq.s32.totalorder %s23, 0
      %p155 = por %p153, %p154
      %s157 = sadd.s32 %s156, 1
      %p160 = scmp.eq.s32.totalorder %s17, 1
      %p161 = scmp.ne.s32.totalorder %s156, %s158
      %p162 = scmp.eq.s32.totalorder %s17, 0
      %p163 = por %p161, %p162
      %p164 = scmp.ne.s32.totalorder %s156, %s158
      %p165 = scmp.eq.s32.totalorder %s22, 1
      %p166 = por %p164, %p165
      %p167 = scmp.ne.s32.totalorder %s158, %s159
      %p168 = scmp.eq.s32.totalorder %s22, 0
      %p169 = por %p167, %p168
      %p170 = scmp.ne.s32.totalorder %s158, %s159
      %p171 = scmp.eq.s32.totalorder %s23, 1
      %p172 = por %p170, %p171
      %p174 = scmp.ne.s32.totalorder %s159, %s173
      %p175 = scmp.eq.s32.totalorder %s23, 0
      %p176 = por %p174, %p175
      %s178 = sadd.s32 %s177, 1
      %p181 = scmp.eq.s32.totalorder %s17, 1
      %p182 = scmp.ne.s32.totalorder %s177, %s179
      %p183 = scmp.eq.s32.totalorder %s17, 0
      %p184 = por %p182, %p183
      %p185 = scmp.ne.s32.totalorder %s177, %s179
      %p186 = scmp.eq.s32.totalorder %s22, 1
      %p187 = por %p185, %p186
      %p188 = scmp.ne.s32.totalorder %s179, %s180
      %p189 = scmp.eq.s32.totalorder %s22, 0
      %p190 = por %p188, %p189
      %p191 = scmp.ne.s32.totalorder %s179, %s180
      %p192 = scmp.eq.s32.totalorder %s23, 1
      %p193 = por %p191, %p192
      %p195 = scmp.ne.s32.totalorder %s180, %s194
      %p196 = scmp.eq.s32.totalorder %s23, 0
      %p197 = por %p195, %p196
      %s199 = sadd.s32 %s198, 1
      %p202 = scmp.eq.s32.totalorder %s17, 1
      %p203 = scmp.ne.s32.totalorder %s198, %s200
      %p204 = scmp.eq.s32.totalorder %s17, 0
      %p205 = por %p203, %p204
      %p206 = scmp.ne.s32.totalorder %s198, %s200
      %p207 = scmp.eq.s32.totalorder %s22, 1
      %p208 = por %p206, %p207
      %p209 = scmp.ne.s32.totalorder %s200, %s201
      %p210 = scmp.eq.s32.totalorder %s22, 0
      %p211 = por %p209, %p210
      %p212 = scmp.ne.s32.totalorder %s200, %s201
      %p213 = scmp.eq.s32.totalorder %s23, 1
      %p214 = por %p212, %p213
      %p216 = scmp.ne.s32.totalorder %s201, %s215
      %p217 = scmp.eq.s32.totalorder %s23, 0
      %p218 = por %p216, %p217
      %s219 = ssub.s32 %s24, %s36
      %p220 = scmp.eq.s32.totalorder %s219, 0
      %s222 = sadd.s32 %s221, 1
      %s223 = scalar_select %p220, %s221, %s222
      %p226 = pneg %p220
      %p227 = scmp.eq.s32.totalorder %s17, 1
      %p228 = por %p226, %p227
      %p229 = scmp.ne.s32.totalorder %s221, %s224
      %p230 = scmp.eq.s32.totalorder %s17, 0
      %p231 = por %p229, %p230
      %p232 = scmp.ne.s32.totalorder %s221, %s224
      %p233 = scmp.eq.s32.totalorder %s22, 1
      %p234 = por %p232, %p233
      %p235 = scmp.ne.s32.totalorder %s224, %s225
      %p236 = scmp.eq.s32.totalorder %s22, 0
      %p237 = por %p235, %p236
      %p238 = scmp.ne.s32.totalorder %s224, %s225
      %p239 = scmp.eq.s32.totalorder %s23, 1
      %p240 = por %p238, %p239
      %p242 = scmp.ne.s32.totalorder %s225, %s241
      %p243 = scmp.eq.s32.totalorder %s23, 0
      %p244 = por %p242, %p243
      %p245 = scmp.le.s32.totalorder 1, %s17
      %p246 = scmp.lt.s32.totalorder %s17, 3
      %p247 = pnand %p245, %p246
      %p248 = pneg %p247
      // Predicated region
      $region9: #{tpu_custom_call.1} parent=5 // pred_check
        _
      $region10: #{tpu_custom_call.1} parent=5 // pred_check_branch
        %250 = sbr.rel (%p247) target = $region12
      $region11: #{tpu_custom_call.1} parent=5 // pred_region
        %s251 = ssub.s32 %s17, 1
        // Predicated region
        $region13: #{tpu_custom_call.1} parent=11 // pred_check
          %p252 = pneg %p106
        $region14: #{tpu_custom_call.1} parent=11 // pred_check_branch
          %254 = sbr.rel (%p252) target = $region16
        $region15: #{tpu_custom_call.1} parent=11 // pred_region
          _
        $region16: #{tpu_custom_call.1} parent=11 // pred_fallthru
          _
        // Predicated region
        $region17: #{tpu_custom_call.1} parent=11 // pred_check
          %p255 = pneg %p127
        $region18: #{tpu_custom_call.1} parent=11 // pred_check_branch
          %257 = sbr.rel (%p255) target = $region20
        $region19: #{tpu_custom_call.1} parent=11 // pred_region
          _
        $region20: #{tpu_custom_call.1} parent=11 // pred_fallthru
          _
        // Predicated region
        $region21: #{tpu_custom_call.1} parent=11 // pred_check
          %p258 = pneg %p148
        $region22: #{tpu_custom_call.1} parent=11 // pred_check_branch
          %260 = sbr.rel (%p258) target = $region24
        $region23: #{tpu_custom_call.1} parent=11 // pred_region
          _
        $region24: #{tpu_custom_call.1} parent=11 // pred_fallthru
          _
        // Predicated region
        $region25: #{tpu_custom_call.1} parent=11 // pred_check
          %p261 = pneg %p169
        $region26: #{tpu_custom_call.1} parent=11 // pred_check_branch
          %263 = sbr.rel (%p261) target = $region28
        $region27: #{tpu_custom_call.1} parent=11 // pred_region
          _
        $region28: #{tpu_custom_call.1} parent=11 // pred_fallthru
          _
        // Predicated region
        $region29: #{tpu_custom_call.1} parent=11 // pred_check
          %p264 = pneg %p190
        $region30: #{tpu_custom_call.1} parent=11 // pred_check_branch
          %266 = sbr.rel (%p264) target = $region32
        $region31: #{tpu_custom_call.1} parent=11 // pred_region
          _
        $region32: #{tpu_custom_call.1} parent=11 // pred_fallthru
          _
        // Predicated region
        $region33: #{tpu_custom_call.1} parent=11 // pred_check
          %p267 = pneg %p211
        $region34: #{tpu_custom_call.1} parent=11 // pred_check_branch
          %269 = sbr.rel (%p267) target = $region36
        $region35: #{tpu_custom_call.1} parent=11 // pred_region
          _
        $region36: #{tpu_custom_call.1} parent=11 // pred_fallthru
          _
      $region12: #{tpu_custom_call.1} parent=5 // pred_fallthru
        _
      %p270 = scmp.lt.s32.totalorder %s17, 2
      // Predicated region
      $region37: #{tpu_custom_call.1} parent=5 // pred_check
        %p271 = pneg %p270
      $region38: #{tpu_custom_call.1} parent=5 // pred_check_branch
        %273 = sbr.rel (%p271) target = $region40
      $region39: #{tpu_custom_call.1} parent=5 // pred_region
        // Predicated region
        $region41: #{tpu_custom_call.1} parent=39 // pred_check
          %p274 = pneg %p51
        $region42: #{tpu_custom_call.1} parent=39 // pred_check_branch
          %276 = sbr.rel (%p274) target = $region44
        $region43: #{tpu_custom_call.1} parent=39 // pred_region
          %s277 = smul.u32 2, %s25
          %p278 = scmp.lt.s32.totalorder %s24, 1
          %s279 = scalar_select %p278, %s24, 1
          %p280 = scmp.lt.s32.totalorder %s277, 1
          %s281 = scalar_select %p280, %s277, 1
          %s282 = smul.addr %s279, 2
          %s283 = sadd.s32 %s281, %s282
          %s284 = smul.addr %s283, 4
          %s285 = scalar_lea.vmem %s0, %s284
          %s286 = smul.u32 2, %s25
        $region44: #{tpu_custom_call.1} parent=39 // pred_fallthru
          _
        // Predicated region
        $region45: #{tpu_custom_call.1} parent=39 // pred_check
          %p287 = pneg %p79
        $region46: #{tpu_custom_call.1} parent=39 // pred_check_branch
          %289 = sbr.rel (%p287) target = $region48
        $region47: #{tpu_custom_call.1} parent=39 // pred_region
          %s290 = smul.u32 2, %s25
          %p291 = scmp.lt.s32.totalorder %s24, 1
          %s292 = scalar_select %p291, %s24, 1
          %p293 = scmp.lt.s32.totalorder %s290, 1
          %s294 = scalar_select %p293, %s290, 1
          %s295 = smul.addr %s292, 2
          %s296 = sadd.s32 %s294, %s295
          %s297 = smul.addr %s296, 8
          %s298 = scalar_lea.vmem %s1, %s297
          %s299 = smul.u32 2, %s25
        $region48: #{tpu_custom_call.1} parent=39 // pred_fallthru
          _
      $region40: #{tpu_custom_call.1} parent=5 // pred_fallthru
        _
      %p300 = scmp.le.s32.totalorder 1, %s17
      %p301 = scmp.lt.s32.totalorder %s17, 3
      %p302 = pnand %p300, %p301
      %p303 = pneg %p302
      // Predicated region
      $region49: #{tpu_custom_call.1} parent=5 // pred_check
        _
      $region50: #{tpu_custom_call.1} parent=5 // pred_check_branch
        %305 = sbr.rel (%p302) target = $region52
      $region51: #{tpu_custom_call.1} parent=5 // pred_region
        %s306 = ssub.s32 %s17, 1
        %s307 = smul.u32 2, %s27
        %p308 = scmp.lt.s32.totalorder %s26, 1
        %s309 = scalar_select %p308, %s26, 1
        %p310 = scmp.lt.s32.totalorder %s307, 1
        %s311 = scalar_select %p310, %s307, 1
        %s312 = smul.addr %s309, 2
        %s313 = sadd.s32 %s311, %s312
        %s314 = smul.addr %s313, 4
        %s315 = scalar_lea.vmem %s0, %s314
        %p316 = pneg %p57
        %p317 = pneg %p54
        %s318 = smul.u32 2, %s27
        %p319 = scmp.lt.s32.totalorder %s26, 1
        %s320 = scalar_select %p319, %s26, 1
        %p321 = scmp.lt.s32.totalorder %s318, 1
        %s322 = scalar_select %p321, %s318, 1
        %s323 = smul.addr %s320, 2
        %s324 = sadd.s32 %s322, %s323
        %s325 = smul.addr %s324, 8
        %s326 = scalar_lea.vmem %s1, %s325
        %p327 = pneg %p85
        %p328 = pneg %p82
        %p329 = pneg %p106
        %p330 = pneg %p103
        %p331 = pneg %p127
        %p332 = pneg %p124
        %p333 = pneg %p148
        %p334 = pneg %p145
        %p335 = pneg %p169
        %p336 = pneg %p166
        %p337 = pneg %p190
        %p338 = pneg %p187
        %p339 = pneg %p211
        %p340 = pneg %p208
        %p341 = pneg %p237
        %p342 = pneg %p234
        %s343 = sand.u32 %s224, 1
        %s344 = scalar_lea.sflag [#allocation6], %s343
        %s345 = sand.u32 %s224, 1
        %s346 = smul.addr %s345, 16
        %s347 = scalar_lea.vmem [#allocation5], %s346
        %s348 = smul.u32 2, %s27
        %p349 = scmp.lt.s32.totalorder %s26, 1
        %s350 = scalar_select %p349, %s26, 1
        %p351 = scmp.lt.s32.totalorder %s348, 1
        %s352 = scalar_select %p351, %s348, 1
        %s353 = smul.addr %s350, 2
        %s354 = sadd.s32 %s352, %s353
        %s355 = smul.addr %s354, 4
        %s356 = scalar_lea.vmem %s0, %s355
        %s357 = smul.u32 2, %s27
        %s358 = smul.u32 2, %s27
        %p359 = scmp.lt.s32.totalorder %s26, 1
        %s360 = scalar_select %p359, %s26, 1
        %p361 = scmp.lt.s32.totalorder %s358, 1
        %s362 = scalar_select %p361, %s358, 1
        %s363 = smul.addr %s360, 2
        %s364 = sadd.s32 %s362, %s363
        %s365 = smul.addr %s364, 8
        %s366 = scalar_lea.vmem %s1, %s365
        %s367 = smul.u32 2, %s27
        %p368 = scmp.eq.s32.totalorder %s27, 0
        // Predicated region
        $region53: #{tpu_custom_call.1} parent=51 // pred_check
          %p369 = pneg %p368
        $region54: #{tpu_custom_call.1} parent=51 // pred_check_branch
          %371 = sbr.rel (%p369) target = $region56
        $region55: #{tpu_custom_call.1} parent=51 // pred_region
          %372 = vst [vmem:[#allocation4] sm:$0xff] 0.0
          %373 = vst [vmem:[#allocation4 + $0x8] sm:$0xff] 0.0
        $region56: #{tpu_custom_call.1} parent=51 // pred_fallthru
          _
        %v374 = vld [vmem:[%s356] sm:$0xff]
        %v375 = vld [vmem:[%s366] sm:$0x3f]
        %v376 = vld [vmem:[%s366 + $0x8] sm:$0x3f]
        %v377 = vld [vmem:[%s2] sm:$0xff]
        %v378 = vld [vmem:[%s3] sm:$0xff]
        %380 = vset.pattern.permute.xlu0 0
        %381 = vperm.xlu0 %380, %v378
        %v382 = vpop.permute.xlu0 %381
        %v385 = vcombine.high %v374, %v374
        %vm386 = vcmask 31744
        %v388 = vsel %vm386, %v377, 0
        %vm390 = vcmask 1043456
        %v391 = vsel %vm390, %v374, 0
        %v393 = vsel %vm390, %v385, 0
        %395 = vmatprep.subr.mxu0 %v393
        %396 = vmatpush1.msra.mxu0 %v391
        %397 = vmatprep.subr.mxu0 0.0
        %398 = vmatpush1.msra.mxu0 0.0
        %399 = vmatprep.subr.mxu0 0.0
        %400 = vmatpush1.msra.mxu0 0.0
        %401 = vmatprep.subr.mxu0 0.0
        %402 = vmatpush1.msra.mxu0 0.0
        %403 = vmatprep.subr.mxu0 0.0
        %404 = vmatpush1.msra.mxu0 0.0
        %405 = vmatprep.subr.mxu0 0.0
        %406 = vmatpush1.msra.mxu0 0.0
        %407 = vmatprep.subr.mxu0 0.0
        %408 = vmatpush1.msra.mxu0 0.0
        %409 = vmatprep.subr.mxu0 0.0
        %410 = vmatpush1.msra.mxu0 0.0
        %411 = vmatprep.subr.mxu0 0.0
        %412 = vmatpush1.msra.mxu0 0.0
        %413 = vmatprep.subr.mxu0 0.0
        %414 = vmatpush1.msra.mxu0 0.0
        %415 = vmatprep.subr.mxu0 0.0
        %416 = vmatpush1.msra.mxu0 0.0
        %417 = vmatprep.subr.mxu0 0.0
        %418 = vmatpush1.msra.mxu0 0.0
        %419 = vmatprep.subr.mxu0 0.0
        %420 = vmatpush1.msra.mxu0 0.0
        %421 = vmatprep.subr.mxu0 0.0
        %422 = vmatpush1.msra.mxu0 0.0
        %423 = vmatprep.subr.mxu0 0.0
        %424 = vmatpush1.msra.mxu0 0.0
        %425 = vmatprep.subr.mxu0 0.0
        %426 = vmatpush1.msra.mxu0 0.0
        %427 = vmatprep.subr.mxu0 0.0
        %428 = vmatpush1.msra.mxu0 0.0
        %429 = vmatprep.subr.mxu0 0.0
        %430 = vmatpush1.msra.mxu0 0.0
        %431 = vmatprep.subr.mxu0 0.0
        %432 = vmatpush1.msra.mxu0 0.0
        %433 = vmatprep.subr.mxu0 0.0
        %434 = vmatpush1.msra.mxu0 0.0
        %435 = vmatprep.subr.mxu0 0.0
        %436 = vmatpush1.msra.mxu0 0.0
        %437 = vmatprep.subr.mxu0 0.0
        %438 = vmatpush1.msra.mxu0 0.0
        %439 = vmatprep.subr.mxu0 0.0
        %440 = vmatpush1.msra.mxu0 0.0
        %441 = vmatprep.subr.mxu0 0.0
        %442 = vmatpush1.msra.mxu0 0.0
        %443 = vmatprep.subr.mxu0 0.0
        %444 = vmatpush1.msra.mxu0 0.0
        %445 = vmatprep.subr.mxu0 0.0
        %446 = vmatpush1.msra.mxu0 0.0
        %447 = vmatprep.subr.mxu0 0.0
        %448 = vmatpush1.msra.mxu0 0.0
        %449 = vmatprep.subr.mxu0 0.0
        %450 = vmatpush1.msra.mxu0 0.0
        %451 = vmatprep.subr.mxu0 0.0
        %452 = vmatpush1.msra.mxu0 0.0
        %453 = vmatprep.subr.mxu0 0.0
        %454 = vmatpush1.msra.mxu0 0.0
        %455 = vmatprep.subr.mxu0 0.0
        %456 = vmatpush1.msra.mxu0 0.0
        %457 = vmatprep.subr.mxu0 0.0
        %458 = vmatpush1.msra.mxu0 0.0
        %459 = vmatprep.mubr.f32.mxu0 0.0
        %460 = vmatmul.mubr.f32.gmra.mrb[0].mxu0 %v388
        %v461 = vpop.f32.mrb[0].mxu0
        %v462 = vadd.f32 %v382, %v461
        %v463 = vpop.f32.mrb[0].mxu0
        %v464 = vadd.f32 %v382, %v463
        %465 = vdwg.mxu0
        %vm466 = vcmp.gt.f32.partialorder %v462, 0.0
        %vm467 = vcmp.gt.f32.partialorder %v464, 0.0
        %v468 = vmul.f32 %v462, 0.1
        %v469 = vmul.f32 %v464, 0.1
        %v470 = vsel %vm466, %v462, %v468
        %v471 = vsel %vm467, %v464, %v469
        %v472 = vld [vmem:[%s4] sm:$0xff]
        %v473 = vld [vmem:[%s5] sm:$0xff]
        %475 = vset.pattern.permute.xlu0 0
        %476 = vperm.xlu0 %475, %v473
        %v477 = vpop.permute.xlu0 %476
        %vm479 = vcmask 48128
        %v481 = vsel %vm479, %v472, 0
        %vm483 = vcmask 1045504
        %v485 = vsel %vm483, %v375, 0
        %v488 = vsel %vm483, %v376, 0
        %490 = vmatprep.subr.mxu0 %v488
        %491 = vmatpush1.msra.mxu0 %v485
        %492 = vmatprep.subr.mxu0 0.0
        %493 = vmatpush1.msra.mxu0 0.0
        %494 = vmatprep.subr.mxu0 0.0
        %495 = vmatpush1.msra.mxu0 0.0
        %496 = vmatprep.subr.mxu0 0.0
        %497 = vmatpush1.msra.mxu0 0.0
        %498 = vmatprep.subr.mxu0 0.0
        %499 = vmatpush1.msra.mxu0 0.0
        %500 = vmatprep.subr.mxu0 0.0
        %501 = vmatpush1.msra.mxu0 0.0
        %502 = vmatprep.subr.mxu0 0.0
        %503 = vmatpush1.msra.mxu0 0.0
        %504 = vmatprep.subr.mxu0 0.0
        %505 = vmatpush1.msra.mxu0 0.0
        %506 = vmatprep.subr.mxu0 0.0
        %507 = vmatpush1.msra.mxu0 0.0
        %508 = vmatprep.subr.mxu0 0.0
        %509 = vmatpush1.msra.mxu0 0.0
        %510 = vmatprep.subr.mxu0 0.0
        %511 = vmatpush1.msra.mxu0 0.0
        %512 = vmatprep.subr.mxu0 0.0
        %513 = vmatpush1.msra.mxu0 0.0
        %514 = vmatprep.subr.mxu0 0.0
        %515 = vmatpush1.msra.mxu0 0.0
        %516 = vmatprep.subr.mxu0 0.0
        %517 = vmatpush1.msra.mxu0 0.0
        %518 = vmatprep.subr.mxu0 0.0
        %519 = vmatpush1.msra.mxu0 0.0
        %520 = vmatprep.subr.mxu0 0.0
        %521 = vmatpush1.msra.mxu0 0.0
        %522 = vmatprep.subr.mxu0 0.0
        %523 = vmatpush1.msra.mxu0 0.0
        %524 = vmatprep.subr.mxu0 0.0
        %525 = vmatpush1.msra.mxu0 0.0
        %526 = vmatprep.subr.mxu0 0.0
        %527 = vmatpush1.msra.mxu0 0.0
        %528 = vmatprep.subr.mxu0 0.0
        %529 = vmatpush1.msra.mxu0 0.0
        %530 = vmatprep.subr.mxu0 0.0
        %531 = vmatpush1.msra.mxu0 0.0
        %532 = vmatprep.subr.mxu0 0.0
        %533 = vmatpush1.msra.mxu0 0.0
        %534 = vmatprep.subr.mxu0 0.0
        %535 = vmatpush1.msra.mxu0 0.0
        %536 = vmatprep.subr.mxu0 0.0
        %537 = vmatpush1.msra.mxu0 0.0
        %538 = vmatprep.subr.mxu0 0.0
        %539 = vmatpush1.msra.mxu0 0.0
        %540 = vmatprep.subr.mxu0 0.0
        %541 = vmatpush1.msra.mxu0 0.0
        %542 = vmatprep.subr.mxu0 0.0
        %543 = vmatpush1.msra.mxu0 0.0
        %544 = vmatprep.subr.mxu0 0.0
        %545 = vmatpush1.msra.mxu0 0.0
        %546 = vmatprep.subr.mxu0 0.0
        %547 = vmatpush1.msra.mxu0 0.0
        %548 = vmatprep.subr.mxu0 0.0
        %549 = vmatpush1.msra.mxu0 0.0
        %550 = vmatprep.subr.mxu0 0.0
        %551 = vmatpush1.msra.mxu0 0.0
        %552 = vmatprep.subr.mxu0 0.0
        %553 = vmatpush1.msra.mxu0 0.0
        %554 = vmatprep.mubr.f32.mxu0 0.0
        %555 = vmatmul.mubr.f32.gmra.mrb[0].mxu0 %v481
        %v556 = vpop.f32.mrb[0].mxu0
        %v557 = vadd.f32 %v477, %v556
        %v558 = vpop.f32.mrb[0].mxu0
        %v559 = vadd.f32 %v477, %v558
        %560 = vdwg.mxu0
        %vm561 = vcmp.gt.f32.partialorder %v557, 0.0
        %vm562 = vcmp.gt.f32.partialorder %v559, 0.0
        %v563 = vmul.f32 %v557, 0.1
        %v564 = vmul.f32 %v559, 0.1
        %v565 = vsel %vm561, %v557, %v563
        %v566 = vsel %vm562, %v559, %v564
        %s567 = smul.u32 %s27, 256
        %s568 = sshra.s32 %s567, 7
        %s569 = sand.u32 %s567, 127
        %s570 = smul.addr %s568, 8
        %s571 = scalar_lea.vmem [#allocation2], %s570
        %572 = vst [vmem:[%s571] sm:$0xff] %v470
        %573 = vst [vmem:[%s571 + $0x8] sm:$0xff] %v471
        %s574 = smul.addr %s568, 8
        %s575 = scalar_lea.vmem [#allocation3], %s574
        %576 = vst [vmem:[%s575] sm:$0xff] %v565
        %577 = vst [vmem:[%s575 + $0x8] sm:$0xff] %v566
        %v578 = vadd.f32 %v470, %v565
        %v579 = vadd.f32 %v471, %v566
        %v580 = vld [vmem:[#allocation4] sm:$0xff]
        %v581 = vld [vmem:[#allocation4 + $0x8] sm:$0xff]
        %v582 = vadd.f32 %v580, %v578
        %v583 = vadd.f32 %v581, %v579
        %584 = vst [vmem:[#allocation4] sm:$0xff] %v582
        %585 = vst [vmem:[#allocation4 + $0x8] sm:$0xff] %v583
        // Predicated region
        $region57: #{tpu_custom_call.1} parent=51 // pred_check
          %p586 = pneg %p368
        $region58: #{tpu_custom_call.1} parent=51 // pred_check_branch
          %588 = sbr.rel (%p586) target = $region60
        $region59: #{tpu_custom_call.1} parent=51 // pred_region
          %v589 = vld [vmem:[#allocation4] sm:$0xff]
          %v590 = vld [vmem:[#allocation4 + $0x8] sm:$0xff]
          %v591 = vld [vmem:[%s6] sm:$0xff]
          %v592 = vld [vmem:[%s7] sm:$0xff]
          %v593 = vld [vmem:[%s7 + $0x8] sm:$0xff]
          %v594 = vadd.f32 %v589, %v590
          %595 = vadd.xlane.f32.xlu0 %v594
          %v596 = vpop.xlane.xlu0 %595
          %v597 = vmul.f32 %v596, 0.00390625
          %vm598 = vcmask 64512
          %v600 = vsel %vm598, %v591, 0
          %602 = vmatprep.subr.mxu0 0.0
          %603 = vmatpush1.msra.mxu0 %v597
          %604 = vmatprep.subr.mxu0 0.0
          %605 = vmatpush1.msra.mxu0 0.0
          %606 = vmatprep.subr.mxu0 0.0
          %607 = vmatpush1.msra.mxu0 0.0
          %608 = vmatprep.subr.mxu0 0.0
          %609 = vmatpush1.msra.mxu0 0.0
          %610 = vmatprep.subr.mxu0 0.0
          %611 = vmatpush1.msra.mxu0 0.0
          %612 = vmatprep.subr.mxu0 0.0
          %613 = vmatpush1.msra.mxu0 0.0
          %614 = vmatprep.subr.mxu0 0.0
          %615 = vmatpush1.msra.mxu0 0.0
          %616 = vmatprep.subr.mxu0 0.0
          %617 = vmatpush1.msra.mxu0 0.0
          %618 = vmatprep.subr.mxu0 0.0
          %619 = vmatpush1.msra.mxu0 0.0
          %620 = vmatprep.subr.mxu0 0.0
          %621 = vmatpush1.msra.mxu0 0.0
          %622 = vmatprep.subr.mxu0 0.0
          %623 = vmatpush1.msra.mxu0 0.0
          %624 = vmatprep.subr.mxu0 0.0
          %625 = vmatpush1.msra.mxu0 0.0
          %626 = vmatprep.subr.mxu0 0.0
          %627 = vmatpush1.msra.mxu0 0.0
          %628 = vmatprep.subr.mxu0 0.0
          %629 = vmatpush1.msra.mxu0 0.0
          %630 = vmatprep.subr.mxu0 0.0
          %631 = vmatpush1.msra.mxu0 0.0
          %632 = vmatprep.subr.mxu0 0.0
          %633 = vmatpush1.msra.mxu0 0.0
          %634 = vmatprep.subr.mxu0 0.0
          %635 = vmatpush1.msra.mxu0 0.0
          %636 = vmatprep.subr.mxu0 0.0
          %637 = vmatpush1.msra.mxu0 0.0
          %638 = vmatprep.subr.mxu0 0.0
          %639 = vmatpush1.msra.mxu0 0.0
          %640 = vmatprep.subr.mxu0 0.0
          %641 = vmatpush1.msra.mxu0 0.0
          %642 = vmatprep.subr.mxu0 0.0
          %643 = vmatpush1.msra.mxu0 0.0
          %644 = vmatprep.subr.mxu0 0.0
          %645 = vmatpush1.msra.mxu0 0.0
          %646 = vmatprep.subr.mxu0 0.0
          %647 = vmatpush1.msra.mxu0 0.0
          %648 = vmatprep.subr.mxu0 0.0
          %649 = vmatpush1.msra.mxu0 0.0
          %650 = vmatprep.subr.mxu0 0.0
          %651 = vmatpush1.msra.mxu0 0.0
          %652 = vmatprep.subr.mxu0 0.0
          %653 = vmatpush1.msra.mxu0 0.0
          %654 = vmatprep.subr.mxu0 0.0
          %655 = vmatpush1.msra.mxu0 0.0
          %656 = vmatprep.subr.mxu0 0.0
          %657 = vmatpush1.msra.mxu0 0.0
          %658 = vmatprep.subr.mxu0 0.0
          %659 = vmatpush1.msra.mxu0 0.0
          %660 = vmatprep.subr.mxu0 0.0
          %661 = vmatpush1.msra.mxu0 0.0
          %662 = vmatprep.subr.mxu0 0.0
          %663 = vmatpush1.msra.mxu0 0.0
          %664 = vmatprep.subr.mxu0 0.0
          %665 = vmatpush1.msra.mxu0 0.0
          %666 = vmatprep.mubr.f32.mxu0 0.0
          %667 = vmatmul.mubr.f32.gmra.mrb[0].mxu0 %v600
          %v668 = vpop.f32.mrb[0].mxu0
          %v669 = vadd.f32 0.0, %v668
          %v670 = vpop.f32.mrb[0].mxu0
          %671 = vdwg.mxu0
          %v672 = vmax.f32 %v669, 0.0
          %v674 = vsel %vm598, %v592, 0
          %v677 = vsel %vm598, %v593, 0
          %679 = vmatprep.subr.mxu0 0.0
          %680 = vmatpush1.msra.mxu0 %v672
          %681 = vmatprep.subr.mxu0 0.0
          %682 = vmatpush1.msra.mxu0 0.0
          %683 = vmatprep.subr.mxu0 0.0
          %684 = vmatpush1.msra.mxu0 0.0
          %685 = vmatprep.subr.mxu0 0.0
          %686 = vmatpush1.msra.mxu0 0.0
          %687 = vmatprep.subr.mxu0 0.0
          %688 = vmatpush1.msra.mxu0 0.0
          %689 = vmatprep.subr.mxu0 0.0
          %690 = vmatpush1.msra.mxu0 0.0
          %691 = vmatprep.subr.mxu0 0.0
          %692 = vmatpush1.msra.mxu0 0.0
          %693 = vmatprep.subr.mxu0 0.0
          %694 = vmatpush1.msra.mxu0 0.0
          %695 = vmatprep.subr.mxu0 0.0
          %696 = vmatpush1.msra.mxu0 0.0
          %697 = vmatprep.subr.mxu0 0.0
          %698 = vmatpush1.msra.mxu0 0.0
          %699 = vmatprep.subr.mxu0 0.0
          %700 = vmatpush1.msra.mxu0 0.0
          %701 = vmatprep.subr.mxu0 0.0
          %702 = vmatpush1.msra.mxu0 0.0
          %703 = vmatprep.subr.mxu0 0.0
          %704 = vmatpush1.msra.mxu0 0.0
          %705 = vmatprep.subr.mxu0 0.0
          %706 = vmatpush1.msra.mxu0 0.0
          %707 = vmatprep.subr.mxu0 0.0
          %708 = vmatpush1.msra.mxu0 0.0
          %709 = vmatprep.subr.mxu0 0.0
          %710 = vmatpush1.msra.mxu0 0.0
          %711 = vmatprep.subr.mxu0 0.0
          %712 = vmatpush1.msra.mxu0 0.0
          %713 = vmatprep.subr.mxu0 0.0
          %714 = vmatpush1.msra.mxu0 0.0
          %715 = vmatprep.subr.mxu0 0.0
          %716 = vmatpush1.msra.mxu0 0.0
          %717 = vmatprep.subr.mxu0 0.0
          %718 = vmatpush1.msra.mxu0 0.0
          %719 = vmatprep.subr.mxu0 0.0
          %720 = vmatpush1.msra.mxu0 0.0
          %721 = vmatprep.subr.mxu0 0.0
          %722 = vmatpush1.msra.mxu0 0.0
          %723 = vmatprep.subr.mxu0 0.0
          %724 = vmatpush1.msra.mxu0 0.0
          %725 = vmatprep.subr.mxu0 0.0
          %726 = vmatpush1.msra.mxu0 0.0
          %727 = vmatprep.subr.mxu0 0.0
          %728 = vmatpush1.msra.mxu0 0.0
          %729 = vmatprep.subr.mxu0 0.0
          %730 = vmatpush1.msra.mxu0 0.0
          %731 = vmatprep.subr.mxu0 0.0
          %732 = vmatpush1.msra.mxu0 0.0
          %733 = vmatprep.subr.mxu0 0.0
          %734 = vmatpush1.msra.mxu0 0.0
          %735 = vmatprep.subr.mxu0 0.0
          %736 = vmatpush1.msra.mxu0 0.0
          %737 = vmatprep.subr.mxu0 0.0
          %738 = vmatpush1.msra.mxu0 0.0
          %739 = vmatprep.subr.mxu0 0.0
          %740 = vmatpush1.msra.mxu0 0.0
          %741 = vmatprep.subr.mxu0 0.0
          %742 = vmatpush1.msra.mxu0 0.0
          %743 = vmatprep.mubr.f32.mxu0 0.0
          %744 = vmatmul.mubr.f32.gmra.mrb[0].mxu0 %v674
          %v745 = vpop.f32.mrb[0].mxu0
          %v746 = vadd.f32 0.0, %v745
          %v747 = vpop.f32.mrb[0].mxu0
          %748 = vmatprep.mubr.f32.mxu0 0.0
          %749 = vmatmul.mubr.f32.gmra.mrb[0].mxu0 %v677
          %v750 = vpop.f32.mrb[0].mxu0
          %v751 = vadd.f32 0.0, %v750
          %v752 = vpop.f32.mrb[0].mxu0
          %753 = vdwg.mxu0
          %v754 = vxor.u32 %v746, 2147483648
          %v755 = vmul.f32 %v754, 1.442695
          %v756 = vpow.pop %v755
          %v757 = vadd.f32 %v756, 1.0
          %v758 = vrcp.pop %v757
          %v759 = vmul.f32 1.0, %v758
          %v760 = vxor.u32 %v751, 2147483648
          %v761 = vmul.f32 %v760, 1.442695
          %v762 = vpow.pop %v761
          %v763 = vadd.f32 %v762, 1.0
          %v764 = vrcp.pop %v763
          %v765 = vmul.f32 1.0, %v764
          %v766 = vmax.f32 %v759, %v765
          %v767 = vsub.f32 %v759, %v766
          %v768 = vmul.f32 %v767, 1.442695
          %v769 = vpow.pop %v768
          %v770 = vsub.f32 %v765, %v766
          %v771 = vmul.f32 %v770, 1.442695
          %v772 = vpow.pop %v771
          %v773 = vadd.f32 %v769, %v772
          %v774 = vrcp.pop %v773
          %v775 = vmul.f32 1.0, %v774
          %v776 = vmul.f32 %v769, %v775
          %v777 = vmul.f32 %v772, %v775
          %v778 = vld [vmem:[#allocation2] sm:$0xff]
          %v779 = vld [vmem:[#allocation2 + $0x8] sm:$0xff]
          %v780 = vld [vmem:[#allocation3] sm:$0xff]
          %v781 = vld [vmem:[#allocation3 + $0x8] sm:$0xff]
          %783 = vset.pattern.permute.xlu0 0
          %784 = vperm.xlu0 %783, %v776
          %v785 = vpop.permute.xlu0 %784
          %v787 = vmul.f32 %v778, %v785
          %v788 = vmul.f32 %v779, %v785
          %790 = vset.pattern.permute.xlu0 0
          %791 = vperm.xlu0 %790, %v777
          %v792 = vpop.permute.xlu0 %791
          %v794 = vmul.f32 %v780, %v792
          %v795 = vmul.f32 %v781, %v792
          %v796 = vadd.f32 %v787, %v794
          %v797 = vadd.f32 %v788, %v795
          %798 = vst [vmem:[%s347] sm:$0xff] %v796
          %799 = vst [vmem:[%s347 + $0x8] sm:$0xff] %v797
        $region60: #{tpu_custom_call.1} parent=51 // pred_fallthru
          _
        %s800 = sand.u32 %s224, 1
        %s801 = scalar_lea.sflag [#allocation6], %s800
        %s802 = sand.u32 %s224, 1
        %s803 = smul.addr %s802, 16
        %s804 = scalar_lea.vmem [#allocation5], %s803
        // Predicated region
        $region61: #{tpu_custom_call.1} parent=51 // pred_check
          %p805 = pneg %p234
        $region62: #{tpu_custom_call.1} parent=51 // pred_check_branch
          %807 = sbr.rel (%p805) target = $region64
        $region63: #{tpu_custom_call.1} parent=51 // pred_region
          %s809 = ssub.s32 256, 256
          %810 = vsyncadd %s801, %s809
          %s811 = smul.addr %s26, 2
          %s812 = smul.addr %s811, 128
          %s813 = scalar_lea.hbm %s8, %s812
          %s815 = sshll.u32 %s804, 4
          %s816 = int_to_ptr.vmem [resolvable:$true] %s815
          %818 = dma.vmem_to_hbm [thread:$0]  %s816, 256, %s813, %s801
        $region64: #{tpu_custom_call.1} parent=51 // pred_fallthru
          _
      $region52: #{tpu_custom_call.1} parent=5 // pred_fallthru
        _
      %p819 = scmp.le.s32.totalorder 2, %s17
      // Predicated region
      $region65: #{tpu_custom_call.1} parent=5 // pred_check
        %p820 = pneg %p819
      $region66: #{tpu_custom_call.1} parent=5 // pred_check_branch
        %822 = sbr.rel (%p820) target = $region68
      $region67: #{tpu_custom_call.1} parent=5 // pred_region
        %s823 = ssub.s32 %s17, 2
        // Predicated region
        $region69: #{tpu_custom_call.1} parent=67 // pred_check
          %p824 = pneg %p240
        $region70: #{tpu_custom_call.1} parent=67 // pred_check_branch
          %826 = sbr.rel (%p824) target = $region72
        $region71: #{tpu_custom_call.1} parent=67 // pred_region
          %s827 = sand.u32 %s225, 1
          %s828 = scalar_lea.sflag [#allocation6], %s827
          %s829 = sand.u32 %s225, 1
          %s830 = smul.addr %s829, 16
          %s831 = scalar_lea.vmem [#allocation5], %s830
          %832 = dma.done %s828, 256
        $region72: #{tpu_custom_call.1} parent=67 // pred_fallthru
          _
      $region68: #{tpu_custom_call.1} parent=5 // pred_fallthru
        _
    $region6: #{tpu_custom_call.1} parent=1 // loop_footer
      %s21 = sadd.s32 1, %s17
    $region7: #{tpu_custom_call.1} parent=1 // loop_footer_branch
      %16 = sbr.rel target = $region3
    $region8: #{tpu_custom_call.1} parent=1 // loop_exit
      _
    %833 = vsyncpa [#allocation6], 1
    %s834 = scalar_lea.sflag [#allocation6], 1
    %835 = vsyncpa %s834, 1

</llo_original>
